<compile_context>
chip_gen: v5e
topology: v5e:2x2
jax: 0.10.0
libtpu: 0.0.40
codegen_flags: <defaults>
</compile_context>

<pallas_src>
import math

import jax
import jax.numpy as jnp
from jax.experimental import pallas as pl
from jax.experimental.pallas import tpu as pltpu


# ----------------------------------------------------------------------------
# Buffer setup (glue, mirrors torch __init__ exactly)
# ----------------------------------------------------------------------------
def make_positional_encoding_table(d_model: int, max_len: int = 5000) -> jnp.ndarray:
    """Builds the (max_len, d_model) float32 sinusoidal table."""
    position = jnp.arange(0, max_len, dtype=jnp.float32)[:, None]            # (L, 1)
    div_term = jnp.exp(
        jnp.arange(0, d_model, 2, dtype=jnp.float32) * (-math.log(10000.0) / d_model)
    )                                                                         # (D/2,)
    angles = position * div_term                                              # (L, D/2)
    pe = jnp.zeros((max_len, d_model), dtype=jnp.float32)
    pe = pe.at[:, 0::2].set(jnp.sin(angles))
    pe = pe.at[:, 1::2].set(jnp.cos(angles))
    return pe                                                                 # (L, D)


# ----------------------------------------------------------------------------
# Pallas kernel:  out[b, s, d] = x[b, s, d] + pe[s, d]   (add done in f32)
# ----------------------------------------------------------------------------
def _pos_enc_kernel(x_ref, pe_ref, o_ref):
    # x_ref / o_ref: (tB, tS, D) block;  pe_ref: (tS, D) block (batch-broadcast).
    o_ref[...] = (x_ref[...].astype(jnp.float32) + pe_ref[...]).astype(o_ref.dtype)


def _choose_tiles(B, S, D, x_itemsize, target_block_bytes=2 * 1024 * 1024):
    """Pick (tB, tS): largest (8,128)-legal divisor tiles near the VMEM budget."""
    row_bytes = S * D * x_itemsize                     # one batch element's slab
    if row_bytes <= target_block_bytes:
        tS = S                                         # full sequence per block
        tB = min(B, max(1, target_block_bytes // row_bytes))
        while B % tB:                                  # tB must divide B
            tB -= 1
    else:
        tB = 1
        tS = S                                         # fallback: full S (always legal)
        for cand in range(S - 1, 0, -1):               # largest mult-of-8 divisor that fits
            if S % cand == 0 and cand % 8 == 0 and cand * D * x_itemsize <= target_block_bytes:
                tS = cand
                break
    return tB, tS


def positional_encoding(x: jnp.ndarray, pe_table: jnp.ndarray) -> jnp.ndarray:
    """x: (B, S, D); pe_table: (max_len, D) float32. Returns x + pe_table[:S] (promoted)."""
    B, S, D = x.shape
    pe_slice = pe_table[:S]                            # (S, D) float32, like torch self.pe[:, :S]
    out_dtype = jnp.promote_types(x.dtype, pe_slice.dtype)   # PyTorch-style promotion

    x_itemsize = jnp.dtype(x.dtype).itemsize
    tB, tS = _choose_tiles(B, S, D, x_itemsize)
    n_s, n_b = S // tS, B // tB

    # VMEM budget: double-buffered x-in and out, pe (2 buffers allocated but only
    # re-DMA'd when the sequence tile changes), plus slack.
    x_blk = tB * tS * D * x_itemsize
    o_blk = tB * tS * D * jnp.dtype(out_dtype).itemsize
    pe_blk = tS * D * 4
    vmem_need = 2 * (x_blk + o_blk + pe_blk) + (1 << 20)
    vmem_limit = int(max(vmem_need, 16 << 20))         # >= v5e default; small blocks keep this low

    return pl.pallas_call(
        _pos_enc_kernel,
        out_shape=jax.ShapeDtypeStruct((B, S, D), out_dtype),
        grid_spec=pltpu.PrefetchScalarGridSpec(
            num_scalar_prefetch=0,
            grid=(n_s, n_b),                            # sequence OUTER, batch INNER
            in_specs=[
                pl.BlockSpec((tB, tS, D), lambda s, b: (b, s, 0)),
                pl.BlockSpec((tS, D), lambda s, b: (s, 0)),   # constant over inner b sweep
            ],
            out_specs=pl.BlockSpec((tB, tS, D), lambda s, b: (b, s, 0)),
        ),
        compiler_params=pltpu.CompilerParams(
            dimension_semantics=("parallel", "parallel"),
            vmem_limit_bytes=vmem_limit,
        ),
    )(x, pe_slice)


# ----------------------------------------------------------------------------
# Demo / self-check
# ----------------------------------------------------------------------------
if __name__ == "__main__":
    # Small shapes consistent with the module's forward: (batch, seq, d_model).
    # D is a multiple of 128 so output stores are lane-dense (real ViT uses D=768).
    B, S, D = 2, 8, 128
    MAX_LEN = 64

    key = jax.random.PRNGKey(0)
    x = jax.random.normal(key, (B, S, D), dtype=jnp.float32)

    pe_table = make_positional_encoding_table(d_model=D, max_len=MAX_LEN)

    out = positional_encoding(x, pe_table)
    out = jax.block_until_ready(out)

    # Pure-JAX reference (same math as torch forward).
    ref = x.astype(jnp.float32) + pe_table[None, :S, :]
    assert out.shape == (B, S, D)
    assert out.dtype == ref.dtype
    assert jnp.allclose(out, ref, atol=1e-6, rtol=1e-6)

    print("KERNEL_OK")
</pallas_src>

<mosaic_0001>
module attributes {stable_mosaic.version = 11 : i64} {
  func.func @_pos_enc_kernel(%arg0: i32, %arg1: i32, %arg2: memref<2x8x128xf32, #tpu.memory_space<vmem>>, %arg3: memref<8x128xf32, #tpu.memory_space<vmem>>, %arg4: memref<2x8x128xf32, #tpu.memory_space<vmem>>) attributes {dimension_semantics = [#tpu.dimension_semantics<parallel>, #tpu.dimension_semantics<parallel>], iteration_bounds = array<i64: 1, 1>, scalar_prefetch = 0 : i64, scratch_operands = 0 : i64, tpu.core_type = #tpu.core_type<tc>, window_params = [{transform_indices = @transform_0, window_bounds = array<i64: 2, 8, 128>}, {transform_indices = @transform_1, window_bounds = array<i64: 8, 128>}, {transform_indices = @transform_2, window_bounds = array<i64: 2, 8, 128>}]} {
    %c0 = arith.constant 0 : index
    %c0_0 = arith.constant 0 : index
    %c0_1 = arith.constant 0 : index
    %0 = vector.load %arg2[%c0, %c0_0, %c0_1] : memref<2x8x128xf32, #tpu.memory_space<vmem>>, vector<2x8x128xf32>
    %c0_2 = arith.constant 0 : index
    %c0_3 = arith.constant 0 : index
    %1 = vector.load %arg3[%c0_2, %c0_3] : memref<8x128xf32, #tpu.memory_space<vmem>>, vector<8x128xf32>
    %2 = vector.shape_cast %1 : vector<8x128xf32> to vector<1x8x128xf32>
    %3 = vector.broadcast %2 : vector<1x8x128xf32> to vector<2x8x128xf32>
    %4 = arith.addf %0, %3 : vector<2x8x128xf32>
    %c0_4 = arith.constant 0 : index
    %c0_5 = arith.constant 0 : index
    %c0_6 = arith.constant 0 : index
    %5 = vector.load %arg4[%c0_4, %c0_5, %c0_6] : memref<2x8x128xf32, #tpu.memory_space<vmem>>, vector<2x8x128xf32>
    tpu.vector_store %arg4[%c0_4, %c0_5, %c0_6], %4 {strides = array<i32>} : memref<2x8x128xf32, #tpu.memory_space<vmem>>, vector<2x8x128xf32>,
    return
  }
  func.func @transform_0(%arg0: i32, %arg1: i32) -> (i32, i32, i32) {
    %c0_i32 = arith.constant 0 : i32
    %c0_i32_0 = arith.constant 0 : i32
    return %arg1, %arg0, %c0_i32 : i32, i32, i32
  }
  func.func @transform_1(%arg0: i32, %arg1: i32) -> (i32, i32) {
    %c0_i32 = arith.constant 0 : i32
    %c0_i32_0 = arith.constant 0 : i32
    return %arg0, %c0_i32 : i32, i32
  }
  func.func @transform_2(%arg0: i32, %arg1: i32) -> (i32, i32, i32) {
    %c0_i32 = arith.constant 0 : i32
    %c0_i32_0 = arith.constant 0 : i32
    return %arg1, %arg0, %c0_i32 : i32, i32, i32
  }
}

</mosaic_0001>

<llo_original>
// kernel: tpu_custom_call.1
$region0: #{tpu_custom_call.1}
  #allocation0 [shape = 'u32[]', space=smem, size = 0x4, offset = 0x4, fixed_abs, tag = 'smem constant byte address 0x4 - core index']
  #allocation1 [shape = 'u32[72,128]{1,0:T(1,128)}', space=vmem, size = 0x9000, scoped, tag = 'internal scratch']
  %s0 = inlined_call_operand.hbm [shape: f32[2,8,128], index: 0, kind: input, shape index: {}]
  %s1 = inlined_call_operand.hbm [shape: f32[8,128], index: 1, kind: input, shape index: {}]
  %s2 = inlined_call_operand.hbm [shape: f32[2,8,128], index: 2, kind: output, shape index: {}]
  %s3 = sld [smem:[#allocation0]]
  $region26: #{tpu_custom_call.1} parent=0
    _
  %s5 = ssub.s32 1, %s3
  %s6 = scalar_select 0, %s5, %s3
  $region1: #{tpu_custom_call.1} parent=0
    #allocation2 [shape = 'u8[8192]{0}', space=vmem, size = 0x2000, scoped, tag = 'input window, operand 0, single buffered']
    #allocation3 [shape = 's32[1]{0}', space=sflag, size = 0x4, scoped, tag = 'scoped memory for tpu_custom_call.1']
    #allocation4 [shape = 's32[1]{0}', space=sflag, size = 0x4, scoped, tag = 'scoped memory for tpu_custom_call.1']
    #allocation5 [shape = 'u8[4096]{0}', space=vmem, size = 0x1000, scoped, tag = 'input window, operand 1, single buffered']
    #allocation6 [shape = 's32[1]{0}', space=sflag, size = 0x4, scoped, tag = 'scoped memory for tpu_custom_call.1']
    #allocation7 [shape = 'u8[8192]{0}', space=vmem, size = 0x2000, scoped, tag = 'output window, operand 0, single buffered']
    %7 = vsyncpa [#allocation3], 0
    %8 = vsyncpa [#allocation6], 0
    %9 = vsyncpa [#allocation4], 0
    // Predicated region
    $region2: #{tpu_custom_call.1} parent=1 // pred_check
      _
    $region3: #{tpu_custom_call.1} parent=1 // pred_check_branch
      %11 = sbr.rel (0) target = $region5
    $region4: #{tpu_custom_call.1} parent=1 // pred_region
      %13 = vsyncadd [#allocation3], 0
      %s14 = sshll.u32 %s0, 4
      %s15 = int_to_ptr.hbm [resolvable:$true] %s14
      %s16 = sshll.u32 [#allocation2], 4
      %s17 = int_to_ptr.vmem [resolvable:$true] %s16
      %22 = dma.hbm_to_vmem [thread:$0]  %s15, 256, %s17, [#allocation3], 128, 128, 8
    $region5: #{tpu_custom_call.1} parent=1 // pred_fallthru
      _
    // Predicated region
    $region6: #{tpu_custom_call.1} parent=1 // pred_check
      _
    $region7: #{tpu_custom_call.1} parent=1 // pred_check_branch
      %24 = sbr.rel (0) target = $region9
    $region8: #{tpu_custom_call.1} parent=1 // pred_region
      %26 = vsyncadd [#allocation6], 0
      %s28 = sshll.u32 %s1, 4
      %s29 = int_to_ptr.hbm [resolvable:$true] %s28
      %s30 = sshll.u32 [#allocation5], 4
      %s31 = int_to_ptr.vmem [resolvable:$true] %s30
      %33 = dma.hbm_to_vmem [thread:$0]  %s29, 128, %s31, [#allocation6]
    $region9: #{tpu_custom_call.1} parent=1 // pred_fallthru
      _
    // Predicated region
    $region10: #{tpu_custom_call.1} parent=1 // pred_check
      _
    $region11: #{tpu_custom_call.1} parent=1 // pred_check_branch
      %35 = sbr.rel (0) target = $region13
    $region12: #{tpu_custom_call.1} parent=1 // pred_region
      %37 = dma.done [#allocation3], 256
    $region13: #{tpu_custom_call.1} parent=1 // pred_fallthru
      _
    // Predicated region
    $region14: #{tpu_custom_call.1} parent=1 // pred_check
      _
    $region15: #{tpu_custom_call.1} parent=1 // pred_check_branch
      %39 = sbr.rel (0) target = $region17
    $region16: #{tpu_custom_call.1} parent=1 // pred_region
      %41 = dma.done [#allocation6], 128
    $region17: #{tpu_custom_call.1} parent=1 // pred_fallthru
      _
    %v42 = vld [vmem:[#allocation2] sm:$0xff]
    %v43 = vld [vmem:[#allocation2 + $0x8] sm:$0xff]
    %v44 = vld [vmem:[#allocation5] sm:$0xff]
    %v45 = vadd.f32 %v42, %v44
    %v46 = vadd.f32 %v43, %v44
    %47 = vst [vmem:[#allocation7] sm:$0xff] %v45
    %48 = vst [vmem:[#allocation7 + $0x8] sm:$0xff] %v46
    // Predicated region
    $region18: #{tpu_custom_call.1} parent=1 // pred_check
      _
    $region19: #{tpu_custom_call.1} parent=1 // pred_check_branch
      %50 = sbr.rel (0) target = $region21
    $region20: #{tpu_custom_call.1} parent=1 // pred_region
      %52 = vsyncadd [#allocation4], 0
      %s53 = sshll.u32 [#allocation7], 4
      %s54 = int_to_ptr.vmem [resolvable:$true] %s53
      %s55 = sshll.u32 %s2, 4
      %s56 = int_to_ptr.hbm [resolvable:$true] %s55
      %61 = dma.vmem_to_hbm [thread:$0]  %s54, 256, %s56, [#allocation4], 128, 128, 8
    $region21: #{tpu_custom_call.1} parent=1 // pred_fallthru
      _
    // Predicated region
    $region22: #{tpu_custom_call.1} parent=1 // pred_check
      _
    $region23: #{tpu_custom_call.1} parent=1 // pred_check_branch
      %63 = sbr.rel (0) target = $region25
    $region24: #{tpu_custom_call.1} parent=1 // pred_region
      %65 = dma.done [#allocation4], 256
    $region25: #{tpu_custom_call.1} parent=1 // pred_fallthru
      _
    %66 = vsyncpa [#allocation3], 1
    %67 = vsyncpa [#allocation6], 1
    %68 = vsyncpa [#allocation4], 1

</llo_original>
